<compile_context>
chip_gen: v7x
topology: tpu7x:2x2x1
jax: 0.10.0
libtpu: 0.0.40
codegen_flags: <defaults>
</compile_context>

<pallas_src>
import jax
import jax.numpy as jnp
from jax.experimental import pallas as pl
from jax.experimental.pallas import tpu as pltpu

HIDDEN_SIZE = 20
INPUT_SIZE = 1
NUM_CLASSES = 1
NUM_LAYERS = 1
SEQ_LENGTH = 3

HIDDEN_PAD = 32     # 4 * 32 = 128 gate rows (16 f32 sublane-tiles)
CLASS_PAD = 8       # output rows padded to one sublane tile


def lstm_kernel(xT_ref, wih_ref, whh_ref, b_ref, wfc_ref, bfc_ref, out_ref):
    # Shapes (batch-in-lanes):
    #   xT_ref : (T, tb)        wih_ref: (4*HP, 1)   whh_ref: (4*HP, HP)
    #   b_ref  : (4*HP, 1)      wfc_ref: (CP, HP)    bfc_ref: (CP, 1)
    #   out_ref: (CP, tb)
    T, tb = xT_ref.shape
    HP = whh_ref.shape[1]

    xT = xT_ref[...].astype(jnp.float32)        # (T, tb)
    wih = wih_ref[...].astype(jnp.float32)      # (4*HP, 1)
    whh = whh_ref[...].astype(jnp.float32)      # (4*HP, HP)
    b = b_ref[...].astype(jnp.float32)          # (4*HP, 1)

    h = jnp.zeros((HP, tb), jnp.float32)
    c = jnp.zeros((HP, tb), jnp.float32)

    # T is small and static -> unrolled loop; one MXU matmul per step on the
    # serial recurrent path, all vector/EUP work at full lane width.
    for t in range(T):
        x_t = xT[t:t + 1, :]                    # (1, tb)
        # Input projection (I == 1): rank-1 outer product on the VPU,
        # independent of h, so it sits off the serial critical path.
        xwb_t = wih * x_t + b                   # (4*HP, tb)
        if t == 0:
            gates = xwb_t                       # h == 0 at t == 0
        else:
            gates = xwb_t + jnp.dot(whh, h, preferred_element_type=jnp.float32)
        i_g = jax.nn.sigmoid(gates[0 * HP:1 * HP, :])
        f_g = jax.nn.sigmoid(gates[1 * HP:2 * HP, :])
        g_g = jnp.tanh(gates[2 * HP:3 * HP, :])
        o_g = jax.nn.sigmoid(gates[3 * HP:4 * HP, :])
        c = f_g * c + i_g * g_g
        h = o_g * jnp.tanh(c)

    # fc head: (CP, HP) @ (HP, tb) + (CP, 1); lane-dense (batch) store.
    out = jnp.dot(wfc_ref[...].astype(jnp.float32), h,
                  preferred_element_type=jnp.float32) + bfc_ref[...]
    out_ref[...] = out.astype(out_ref.dtype)


def _pick_batch_tile(B, tb_max=512):
    """Lane-dense batch tile; >=2 grid steps when B allows (v7x dual-TC)."""
    if B <= 128:
        return B                                 # single full-batch tile
    half = -(-B // 2)                            # ceil(B / 2)
    tb = -(-half // 128) * 128                   # round up to lane-dense tile
    return max(128, min(tb, tb_max))


def lstm_forward(x, packed_params, num_classes=NUM_CLASSES, tb_max=512):
    """x: (batch, seq, input_size) f32 -> (batch, num_classes) f32."""
    w_ih_p, w_hh_p, bias_col, w_fc_p, b_fc_col = packed_params
    B, T, I = x.shape
    assert I == 1, "module spec fixes input_size=1"
    HP = w_hh_p.shape[1]
    CP = w_fc_p.shape[0]

    # Squeeze the degenerate I=1 axis and put batch on the lane axis.
    xT = jnp.transpose(x[:, :, 0])               # (T, B)

    tb = _pick_batch_tile(B, tb_max)
    grid = (pl.cdiv(B, tb),)

    out_T = pl.pallas_call(
        lstm_kernel,
        out_shape=jax.ShapeDtypeStruct((CP, B), jnp.float32),
        grid=grid,
        in_specs=[
            pl.BlockSpec((T, tb), lambda i: (0, i)),          # x, batch in lanes
            pl.BlockSpec((4 * HP, 1), lambda i: (0, 0)),      # W_ih column
            pl.BlockSpec((4 * HP, HP), lambda i: (0, 0)),     # W_hh
            pl.BlockSpec((4 * HP, 1), lambda i: (0, 0)),      # bias column
            pl.BlockSpec((CP, HP), lambda i: (0, 0)),         # W_fc
            pl.BlockSpec((CP, 1), lambda i: (0, 0)),          # b_fc column
        ],
        out_specs=pl.BlockSpec((CP, tb), lambda i: (0, i)),
        compiler_params=pltpu.CompilerParams(
            dimension_semantics=("parallel",),     # shard batch tiles over TCs (v7x)
            vmem_limit_bytes=32 * 1024 * 1024,     # safe on v5e/v6e/v7x
        ),
    )(xT, w_ih_p, w_hh_p, bias_col, w_fc_p, b_fc_col)

    return jnp.transpose(out_T[:num_classes, :])   # (B, num_classes)


def init_raw_params(key, input_size, hidden_size, num_classes):
    """PyTorch-layout weights, U(-1/sqrt(H), 1/sqrt(H)) like nn.LSTM/nn.Linear."""
    k = 1.0 / jnp.sqrt(jnp.float32(hidden_size))
    keys = jax.random.split(key, 6)
    w_ih = jax.random.uniform(keys[0], (4 * hidden_size, input_size),
                              jnp.float32, -k, k)
    w_hh = jax.random.uniform(keys[1], (4 * hidden_size, hidden_size),
                              jnp.float32, -k, k)
    b_ih = jax.random.uniform(keys[2], (4 * hidden_size,), jnp.float32, -k, k)
    b_hh = jax.random.uniform(keys[3], (4 * hidden_size,), jnp.float32, -k, k)
    w_fc = jax.random.uniform(keys[4], (num_classes, hidden_size),
                              jnp.float32, -k, k)
    b_fc = jax.random.uniform(keys[5], (num_classes,), jnp.float32, -k, k)
    return (w_ih, w_hh, b_ih, b_hh, w_fc, b_fc)


def pack_params(raw, hidden_pad=HIDDEN_PAD, class_pad=CLASS_PAD):
    """Per-gate zero-pad to the kernel's batch-in-lanes layout (no transposes)."""
    w_ih, w_hh, b_ih, b_hh, w_fc, b_fc = raw
    four_h, I = w_ih.shape
    H = four_h // 4
    C = w_fc.shape[0]
    HP, CP = hidden_pad, class_pad
    dh, dc = HP - H, CP - C

    # (4H, I) -> (4, H, I) -> pad each gate's rows H->HP -> (4*HP, I)
    w_ih_p = jnp.pad(w_ih.reshape(4, H, I),
                     ((0, 0), (0, dh), (0, 0))).reshape(4 * HP, I)
    # (4H, H) -> (4, H, H) -> pad gate rows H->HP and h-columns H->HP -> (4*HP, HP)
    w_hh_p = jnp.pad(w_hh.reshape(4, H, H),
                     ((0, 0), (0, dh), (0, dh))).reshape(4 * HP, HP)
    # combined bias column; pad rows = 0 so padded h/c rows stay exactly 0
    bias_col = jnp.pad((b_ih + b_hh).reshape(4, H),
                       ((0, 0), (0, dh))).reshape(4 * HP, 1)
    # fc: pad rows C->CP (sublane-aligned output) and cols H->HP with zeros
    w_fc_p = jnp.pad(w_fc, ((0, dc), (0, dh)))               # (CP, HP)
    b_fc_col = jnp.pad(b_fc, (0, dc)).reshape(CP, 1)         # (CP, 1)

    return (w_ih_p, w_hh_p, bias_col, w_fc_p, b_fc_col)


def lstm_reference(x, raw):
    """Pure-JAX reference matching PyTorch nn.LSTM + nn.Linear semantics."""
    w_ih, w_hh, b_ih, b_hh, w_fc, b_fc = raw
    B, T, _ = x.shape
    H = w_hh.shape[1]
    h = jnp.zeros((B, H), jnp.float32)
    c = jnp.zeros((B, H), jnp.float32)
    for t in range(T):
        g = x[:, t, :] @ w_ih.T + h @ w_hh.T + b_ih + b_hh
        i_g = jax.nn.sigmoid(g[:, 0 * H:1 * H])
        f_g = jax.nn.sigmoid(g[:, 1 * H:2 * H])
        g_g = jnp.tanh(g[:, 2 * H:3 * H])
        o_g = jax.nn.sigmoid(g[:, 3 * H:4 * H])
        c = f_g * c + i_g * g_g
        h = o_g * jnp.tanh(c)
    return h @ w_fc.T + b_fc


if __name__ == "__main__":
    key = jax.random.PRNGKey(0)
    pkey, xkey = jax.random.split(key)

    raw = init_raw_params(pkey, INPUT_SIZE, HIDDEN_SIZE, NUM_CLASSES)
    packed = pack_params(raw)

    # batch=2: the module's small demo shape (single tile).
    # batch=256: exercises the lane-dense multi-tile path (tb=128, grid=2).
    for batch in (2, 256):
        x = jax.random.normal(jax.random.fold_in(xkey, batch),
                              (batch, SEQ_LENGTH, INPUT_SIZE), jnp.float32)
        out = lstm_forward(x, packed)
        jax.block_until_ready(out)
        assert out.shape == (batch, NUM_CLASSES), out.shape

        ref = lstm_reference(x, raw)
        max_err = float(jnp.max(jnp.abs(out - ref)))
        assert max_err < 1e-3, f"batch={batch}: max abs error vs reference {max_err}"

    print("KERNEL_OK")
</pallas_src>

<mosaic_0001>
module attributes {stable_mosaic.version = 11 : i64} {
  func.func @lstm_kernel(%arg0: i32, %arg1: memref<3x2xf32, #tpu.memory_space<vmem>>, %arg2: memref<128x1xf32, #tpu.memory_space<vmem>>, %arg3: memref<128x32xf32, #tpu.memory_space<vmem>>, %arg4: memref<128x1xf32, #tpu.memory_space<vmem>>, %arg5: memref<8x32xf32, #tpu.memory_space<vmem>>, %arg6: memref<8x1xf32, #tpu.memory_space<vmem>>, %arg7: memref<8x2xf32, #tpu.memory_space<vmem>>) attributes {dimension_semantics = [#tpu.dimension_semantics<parallel>], iteration_bounds = array<i64: 1>, scalar_prefetch = 0 : i64, scratch_operands = 0 : i64, tpu.core_type = #tpu.core_type<tc>, window_params = [{transform_indices = @transform_0, window_bounds = array<i64: 3, 2>}, {pipeline_mode = #tpu.pipeline_mode<synchronous>, transform_indices = @transform_1, window_bounds = array<i64: 128, 1>}, {pipeline_mode = #tpu.pipeline_mode<synchronous>, transform_indices = @transform_2, window_bounds = array<i64: 128, 32>}, {pipeline_mode = #tpu.pipeline_mode<synchronous>, transform_indices = @transform_3, window_bounds = array<i64: 128, 1>}, {pipeline_mode = #tpu.pipeline_mode<synchronous>, transform_indices = @transform_4, window_bounds = array<i64: 8, 32>}, {pipeline_mode = #tpu.pipeline_mode<synchronous>, transform_indices = @transform_5, window_bounds = array<i64: 8, 1>}, {transform_indices = @transform_6, window_bounds = array<i64: 8, 2>}]} {
    %c0 = arith.constant 0 : index
    %c0_0 = arith.constant 0 : index
    %0 = vector.load %arg1[%c0, %c0_0] : memref<3x2xf32, #tpu.memory_space<vmem>>, vector<3x2xf32>
    %c0_1 = arith.constant 0 : index
    %c0_2 = arith.constant 0 : index
    %1 = vector.load %arg2[%c0_1, %c0_2] : memref<128x1xf32, #tpu.memory_space<vmem>>, vector<128x1xf32>
    %c0_3 = arith.constant 0 : index
    %c0_4 = arith.constant 0 : index
    %2 = vector.load %arg3[%c0_3, %c0_4] : memref<128x32xf32, #tpu.memory_space<vmem>>, vector<128x32xf32>
    %c0_5 = arith.constant 0 : index
    %c0_6 = arith.constant 0 : index
    %3 = vector.load %arg4[%c0_5, %c0_6] : memref<128x1xf32, #tpu.memory_space<vmem>>, vector<128x1xf32>
    %cst = arith.constant 0.000000e+00 : f32
    %4 = vector.broadcast %cst : f32 to vector<32x2xf32>
    %5 = vector.extract_strided_slice %0 {offsets = [0, 0], sizes = [1, 2], strides = [1, 1]} : vector<3x2xf32> to vector<1x2xf32>
    %6 = vector.broadcast %1 : vector<128x1xf32> to vector<128x2xf32>
    %7 = vector.broadcast %5 : vector<1x2xf32> to vector<128x2xf32>
    %8 = arith.mulf %6, %7 : vector<128x2xf32>
    %9 = vector.broadcast %3 : vector<128x1xf32> to vector<128x2xf32>
    %10 = arith.addf %8, %9 : vector<128x2xf32>
    %11 = vector.extract_strided_slice %10 {offsets = [0, 0], sizes = [32, 2], strides = [1, 1]} : vector<128x2xf32> to vector<32x2xf32>
    %12 = arith.negf %11 : vector<32x2xf32>
    %13 = math.exp %12 : vector<32x2xf32>
    %cst_7 = arith.constant 1.000000e+00 : f32
    %14 = vector.broadcast %cst_7 : f32 to vector<32x2xf32>
    %15 = arith.addf %14, %13 : vector<32x2xf32>
    %16 = arith.divf %14, %15 : vector<32x2xf32>
    %17 = vector.extract_strided_slice %10 {offsets = [32, 0], sizes = [32, 2], strides = [1, 1]} : vector<128x2xf32> to vector<32x2xf32>
    %18 = arith.negf %17 : vector<32x2xf32>
    %19 = math.exp %18 : vector<32x2xf32>
    %cst_8 = arith.constant 1.000000e+00 : f32
    %20 = vector.broadcast %cst_8 : f32 to vector<32x2xf32>
    %21 = arith.addf %20, %19 : vector<32x2xf32>
    %22 = arith.divf %20, %21 : vector<32x2xf32>
    %23 = vector.extract_strided_slice %10 {offsets = [64, 0], sizes = [32, 2], strides = [1, 1]} : vector<128x2xf32> to vector<32x2xf32>
    %24 = math.tanh %23 : vector<32x2xf32>
    %25 = vector.extract_strided_slice %10 {offsets = [96, 0], sizes = [32, 2], strides = [1, 1]} : vector<128x2xf32> to vector<32x2xf32>
    %26 = arith.negf %25 : vector<32x2xf32>
    %27 = math.exp %26 : vector<32x2xf32>
    %cst_9 = arith.constant 1.000000e+00 : f32
    %28 = vector.broadcast %cst_9 : f32 to vector<32x2xf32>
    %29 = arith.addf %28, %27 : vector<32x2xf32>
    %30 = arith.divf %28, %29 : vector<32x2xf32>
    %31 = arith.mulf %22, %4 : vector<32x2xf32>
    %32 = arith.mulf %16, %24 : vector<32x2xf32>
    %33 = arith.addf %31, %32 : vector<32x2xf32>
    %34 = math.tanh %33 : vector<32x2xf32>
    %35 = arith.mulf %30, %34 : vector<32x2xf32>
    %36 = vector.extract_strided_slice %0 {offsets = [1, 0], sizes = [1, 2], strides = [1, 1]} : vector<3x2xf32> to vector<1x2xf32>
    %37 = vector.broadcast %1 : vector<128x1xf32> to vector<128x2xf32>
    %38 = vector.broadcast %36 : vector<1x2xf32> to vector<128x2xf32>
    %39 = arith.mulf %37, %38 : vector<128x2xf32>
    %40 = vector.broadcast %3 : vector<128x1xf32> to vector<128x2xf32>
    %41 = arith.addf %39, %40 : vector<128x2xf32>
    %cst_10 = arith.constant dense<0.000000e+00> : vector<128x2xf32>
    %42 = tpu.matmul %2, %35, %cst_10 {dimension_numbers = #tpu.dot_dimension_numbers<[1], [0], [0], [1], [0, 0, 1, 1], [], []>} : vector<128x32xf32>, vector<32x2xf32>, vector<128x2xf32> -> vector<128x2xf32>
    %43 = arith.addf %41, %42 : vector<128x2xf32>
    %44 = vector.extract_strided_slice %43 {offsets = [0, 0], sizes = [32, 2], strides = [1, 1]} : vector<128x2xf32> to vector<32x2xf32>
    %45 = arith.negf %44 : vector<32x2xf32>
    %46 = math.exp %45 : vector<32x2xf32>
    %cst_11 = arith.constant 1.000000e+00 : f32
    %47 = vector.broadcast %cst_11 : f32 to vector<32x2xf32>
    %48 = arith.addf %47, %46 : vector<32x2xf32>
    %49 = arith.divf %47, %48 : vector<32x2xf32>
    %50 = vector.extract_strided_slice %43 {offsets = [32, 0], sizes = [32, 2], strides = [1, 1]} : vector<128x2xf32> to vector<32x2xf32>
    %51 = arith.negf %50 : vector<32x2xf32>
    %52 = math.exp %51 : vector<32x2xf32>
    %cst_12 = arith.constant 1.000000e+00 : f32
    %53 = vector.broadcast %cst_12 : f32 to vector<32x2xf32>
    %54 = arith.addf %53, %52 : vector<32x2xf32>
    %55 = arith.divf %53, %54 : vector<32x2xf32>
    %56 = vector.extract_strided_slice %43 {offsets = [64, 0], sizes = [32, 2], strides = [1, 1]} : vector<128x2xf32> to vector<32x2xf32>
    %57 = math.tanh %56 : vector<32x2xf32>
    %58 = vector.extract_strided_slice %43 {offsets = [96, 0], sizes = [32, 2], strides = [1, 1]} : vector<128x2xf32> to vector<32x2xf32>
    %59 = arith.negf %58 : vector<32x2xf32>
    %60 = math.exp %59 : vector<32x2xf32>
    %cst_13 = arith.constant 1.000000e+00 : f32
    %61 = vector.broadcast %cst_13 : f32 to vector<32x2xf32>
    %62 = arith.addf %61, %60 : vector<32x2xf32>
    %63 = arith.divf %61, %62 : vector<32x2xf32>
    %64 = arith.mulf %55, %33 : vector<32x2xf32>
    %65 = arith.mulf %49, %57 : vector<32x2xf32>
    %66 = arith.addf %64, %65 : vector<32x2xf32>
    %67 = math.tanh %66 : vector<32x2xf32>
    %68 = arith.mulf %63, %67 : vector<32x2xf32>
    %69 = vector.extract_strided_slice %0 {offsets = [2, 0], sizes = [1, 2], strides = [1, 1]} : vector<3x2xf32> to vector<1x2xf32>
    %70 = vector.broadcast %1 : vector<128x1xf32> to vector<128x2xf32>
    %71 = vector.broadcast %69 : vector<1x2xf32> to vector<128x2xf32>
    %72 = arith.mulf %70, %71 : vector<128x2xf32>
    %73 = vector.broadcast %3 : vector<128x1xf32> to vector<128x2xf32>
    %74 = arith.addf %72, %73 : vector<128x2xf32>
    %cst_14 = arith.constant dense<0.000000e+00> : vector<128x2xf32>
    %75 = tpu.matmul %2, %68, %cst_14 {dimension_numbers = #tpu.dot_dimension_numbers<[1], [0], [0], [1], [0, 0, 1, 1], [], []>} : vector<128x32xf32>, vector<32x2xf32>, vector<128x2xf32> -> vector<128x2xf32>
    %76 = arith.addf %74, %75 : vector<128x2xf32>
    %77 = vector.extract_strided_slice %76 {offsets = [0, 0], sizes = [32, 2], strides = [1, 1]} : vector<128x2xf32> to vector<32x2xf32>
    %78 = arith.negf %77 : vector<32x2xf32>
    %79 = math.exp %78 : vector<32x2xf32>
    %cst_15 = arith.constant 1.000000e+00 : f32
    %80 = vector.broadcast %cst_15 : f32 to vector<32x2xf32>
    %81 = arith.addf %80, %79 : vector<32x2xf32>
    %82 = arith.divf %80, %81 : vector<32x2xf32>
    %83 = vector.extract_strided_slice %76 {offsets = [32, 0], sizes = [32, 2], strides = [1, 1]} : vector<128x2xf32> to vector<32x2xf32>
    %84 = arith.negf %83 : vector<32x2xf32>
    %85 = math.exp %84 : vector<32x2xf32>
    %cst_16 = arith.constant 1.000000e+00 : f32
    %86 = vector.broadcast %cst_16 : f32 to vector<32x2xf32>
    %87 = arith.addf %86, %85 : vector<32x2xf32>
    %88 = arith.divf %86, %87 : vector<32x2xf32>
    %89 = vector.extract_strided_slice %76 {offsets = [64, 0], sizes = [32, 2], strides = [1, 1]} : vector<128x2xf32> to vector<32x2xf32>
    %90 = math.tanh %89 : vector<32x2xf32>
    %91 = vector.extract_strided_slice %76 {offsets = [96, 0], sizes = [32, 2], strides = [1, 1]} : vector<128x2xf32> to vector<32x2xf32>
    %92 = arith.negf %91 : vector<32x2xf32>
    %93 = math.exp %92 : vector<32x2xf32>
    %cst_17 = arith.constant 1.000000e+00 : f32
    %94 = vector.broadcast %cst_17 : f32 to vector<32x2xf32>
    %95 = arith.addf %94, %93 : vector<32x2xf32>
    %96 = arith.divf %94, %95 : vector<32x2xf32>
    %97 = arith.mulf %88, %66 : vector<32x2xf32>
    %98 = arith.mulf %82, %90 : vector<32x2xf32>
    %99 = arith.addf %97, %98 : vector<32x2xf32>
    %100 = math.tanh %99 : vector<32x2xf32>
    %101 = arith.mulf %96, %100 : vector<32x2xf32>
    %c0_18 = arith.constant 0 : index
    %c0_19 = arith.constant 0 : index
    %102 = vector.load %arg5[%c0_18, %c0_19] : memref<8x32xf32, #tpu.memory_space<vmem>>, vector<8x32xf32>
    %cst_20 = arith.constant dense<0.000000e+00> : vector<8x2xf32>
    %103 = tpu.matmul %102, %101, %cst_20 {dimension_numbers = #tpu.dot_dimension_numbers<[1], [0], [0], [1], [0, 0, 1, 1], [], []>} : vector<8x32xf32>, vector<32x2xf32>, vector<8x2xf32> -> vector<8x2xf32>
    %c0_21 = arith.constant 0 : index
    %c0_22 = arith.constant 0 : index
    %104 = vector.load %arg6[%c0_21, %c0_22] : memref<8x1xf32, #tpu.memory_space<vmem>>, vector<8x1xf32>
    %105 = vector.broadcast %104 : vector<8x1xf32> to vector<8x2xf32>
    %106 = arith.addf %103, %105 : vector<8x2xf32>
    %c0_23 = arith.constant 0 : index
    %c0_24 = arith.constant 0 : index
    %107 = vector.load %arg7[%c0_23, %c0_24] : memref<8x2xf32, #tpu.memory_space<vmem>>, vector<8x2xf32>
    tpu.vector_store %arg7[%c0_23, %c0_24], %106 {strides = array<i32>} : memref<8x2xf32, #tpu.memory_space<vmem>>, vector<8x2xf32>,
    return
  }
  func.func @transform_0(%arg0: i32) -> (i32, i32) {
    %c0_i32 = arith.constant 0 : i32
    %c0_i32_0 = arith.constant 0 : i32
    return %c0_i32, %arg0 : i32, i32
  }
  func.func @transform_1(%arg0: i32) -> (i32, i32) {
    %c0_i32 = arith.constant 0 : i32
    %c0_i32_0 = arith.constant 0 : i32
    %c0_i32_1 = arith.constant 0 : i32
    return %c0_i32, %c0_i32_0 : i32, i32
  }
  func.func @transform_2(%arg0: i32) -> (i32, i32) {
    %c0_i32 = arith.constant 0 : i32
    %c0_i32_0 = arith.constant 0 : i32
    %c0_i32_1 = arith.constant 0 : i32
    return %c0_i32, %c0_i32_0 : i32, i32
  }
  func.func @transform_3(%arg0: i32) -> (i32, i32) {
    %c0_i32 = arith.constant 0 : i32
    %c0_i32_0 = arith.constant 0 : i32
    %c0_i32_1 = arith.constant 0 : i32
    return %c0_i32, %c0_i32_0 : i32, i32
  }
  func.func @transform_4(%arg0: i32) -> (i32, i32) {
    %c0_i32 = arith.constant 0 : i32
    %c0_i32_0 = arith.constant 0 : i32
    %c0_i32_1 = arith.constant 0 : i32
    return %c0_i32, %c0_i32_0 : i32, i32
  }
  func.func @transform_5(%arg0: i32) -> (i32, i32) {
    %c0_i32 = arith.constant 0 : i32
    %c0_i32_0 = arith.constant 0 : i32
    %c0_i32_1 = arith.constant 0 : i32
    return %c0_i32, %c0_i32_0 : i32, i32
  }
  func.func @transform_6(%arg0: i32) -> (i32, i32) {
    %c0_i32 = arith.constant 0 : i32
    %c0_i32_0 = arith.constant 0 : i32
    return %c0_i32, %arg0 : i32, i32
  }
}

</mosaic_0001>

<llo_original>
// kernel: tpu_custom_call.1
$region0: #{tpu_custom_call.1}
  #allocation0 [shape = 'u32[]', space=smem, size = 0x4, offset = 0x4, fixed_abs, tag = 'smem constant byte address 0x4 - core index']
  #allocation1 [shape = 'u32[144,128]{1,0:T(1,128)}', space=vmem, size = 0x12000, scoped, tag = 'internal scratch']
  %s0 = inlined_call_operand.vmem [shape: f32[3,2], index: 0, kind: input, shape index: {}]
  %s1 = inlined_call_operand.vmem [shape: f32[128,1], index: 1, kind: input, shape index: {}]
  %s2 = inlined_call_operand.vmem [shape: f32[128,32], index: 2, kind: input, shape index: {}]
  %s3 = inlined_call_operand.vmem [shape: f32[128,1], index: 3, kind: input, shape index: {}]
  %s4 = inlined_call_operand.vmem [shape: f32[8,32], index: 4, kind: input, shape index: {}]
  %s5 = inlined_call_operand.vmem [shape: f32[8,1], index: 5, kind: input, shape index: {}]
  %s6 = inlined_call_operand.vmem [shape: f32[8,2], index: 6, kind: output, shape index: {}]
  %s7 = sld [smem:[#allocation0]]
  $region34: #{tpu_custom_call.1} parent=0
    _
  %s9 = ssub.s32 1, %s7
  %s10 = scalar_select 0, %s9, %s7
  // Predicated region
  $region2: #{tpu_custom_call.1} parent=0 // pred_check
    _
  $region3: #{tpu_custom_call.1} parent=0 // pred_check_branch
    %12 = sbr.rel (0) target = $region5
  $region4: #{tpu_custom_call.1} parent=0 // pred_region
    _
  $region5: #{tpu_custom_call.1} parent=0 // pred_fallthru
    _
  // Predicated region
  $region6: #{tpu_custom_call.1} parent=0 // pred_check
    _
  $region7: #{tpu_custom_call.1} parent=0 // pred_check_branch
    %14 = sbr.rel (0) target = $region9
  $region8: #{tpu_custom_call.1} parent=0 // pred_region
    _
  $region9: #{tpu_custom_call.1} parent=0 // pred_fallthru
    _
  // Predicated region
  $region10: #{tpu_custom_call.1} parent=0 // pred_check
    _
  $region11: #{tpu_custom_call.1} parent=0 // pred_check_branch
    %16 = sbr.rel (0) target = $region13
  $region12: #{tpu_custom_call.1} parent=0 // pred_region
    _
  $region13: #{tpu_custom_call.1} parent=0 // pred_fallthru
    _
  // Predicated region
  $region14: #{tpu_custom_call.1} parent=0 // pred_check
    _
  $region15: #{tpu_custom_call.1} parent=0 // pred_check_branch
    %18 = sbr.rel (0) target = $region17
  $region16: #{tpu_custom_call.1} parent=0 // pred_region
    _
  $region17: #{tpu_custom_call.1} parent=0 // pred_fallthru
    _
  // Predicated region
  $region18: #{tpu_custom_call.1} parent=0 // pred_check
    _
  $region19: #{tpu_custom_call.1} parent=0 // pred_check_branch
    %20 = sbr.rel (0) target = $region21
  $region20: #{tpu_custom_call.1} parent=0 // pred_region
    _
  $region21: #{tpu_custom_call.1} parent=0 // pred_fallthru
    _
  // Predicated region
  $region22: #{tpu_custom_call.1} parent=0 // pred_check
    _
  $region23: #{tpu_custom_call.1} parent=0 // pred_check_branch
    %22 = sbr.rel (0) target = $region25
  $region24: #{tpu_custom_call.1} parent=0 // pred_region
    _
  $region25: #{tpu_custom_call.1} parent=0 // pred_fallthru
    _
  %v23 = vld [vmem:[%s0] sm:$0x7]
  %v24 = vld [vmem:[%s1] sm:$0xff]
  %v25 = vld [vmem:[%s1 + $0x8] sm:$0xff]
  %v26 = vld [vmem:[%s1 + $0x10] sm:$0xff]
  %v27 = vld [vmem:[%s1 + $0x18] sm:$0xff]
  %v28 = vld [vmem:[%s1 + $0x20] sm:$0xff]
  %v29 = vld [vmem:[%s1 + $0x28] sm:$0xff]
  %v30 = vld [vmem:[%s1 + $0x30] sm:$0xff]
  %v31 = vld [vmem:[%s1 + $0x38] sm:$0xff]
  %v32 = vld [vmem:[%s1 + $0x40] sm:$0xff]
  %v33 = vld [vmem:[%s1 + $0x48] sm:$0xff]
  %v34 = vld [vmem:[%s1 + $0x50] sm:$0xff]
  %v35 = vld [vmem:[%s1 + $0x58] sm:$0xff]
  %v36 = vld [vmem:[%s1 + $0x60] sm:$0xff]
  %v37 = vld [vmem:[%s1 + $0x68] sm:$0xff]
  %v38 = vld [vmem:[%s1 + $0x70] sm:$0xff]
  %v39 = vld [vmem:[%s1 + $0x78] sm:$0xff]
  %v40 = vld [vmem:[%s2] sm:$0xff]
  %v41 = vld [vmem:[%s2 + $0x8] sm:$0xff]
  %v42 = vld [vmem:[%s2 + $0x10] sm:$0xff]
  %v43 = vld [vmem:[%s2 + $0x18] sm:$0xff]
  %v44 = vld [vmem:[%s2 + $0x20] sm:$0xff]
  %v45 = vld [vmem:[%s2 + $0x28] sm:$0xff]
  %v46 = vld [vmem:[%s2 + $0x30] sm:$0xff]
  %v47 = vld [vmem:[%s2 + $0x38] sm:$0xff]
  %v48 = vld [vmem:[%s2 + $0x40] sm:$0xff]
  %v49 = vld [vmem:[%s2 + $0x48] sm:$0xff]
  %v50 = vld [vmem:[%s2 + $0x50] sm:$0xff]
  %v51 = vld [vmem:[%s2 + $0x58] sm:$0xff]
  %v52 = vld [vmem:[%s2 + $0x60] sm:$0xff]
  %v53 = vld [vmem:[%s2 + $0x68] sm:$0xff]
  %v54 = vld [vmem:[%s2 + $0x70] sm:$0xff]
  %v55 = vld [vmem:[%s2 + $0x78] sm:$0xff]
  %v56 = vld [vmem:[%s3] sm:$0xff]
  %v57 = vld [vmem:[%s3 + $0x8] sm:$0xff]
  %v58 = vld [vmem:[%s3 + $0x10] sm:$0xff]
  %v59 = vld [vmem:[%s3 + $0x18] sm:$0xff]
  %v60 = vld [vmem:[%s3 + $0x20] sm:$0xff]
  %v61 = vld [vmem:[%s3 + $0x28] sm:$0xff]
  %v62 = vld [vmem:[%s3 + $0x30] sm:$0xff]
  %v63 = vld [vmem:[%s3 + $0x38] sm:$0xff]
  %v64 = vld [vmem:[%s3 + $0x40] sm:$0xff]
  %v65 = vld [vmem:[%s3 + $0x48] sm:$0xff]
  %v66 = vld [vmem:[%s3 + $0x50] sm:$0xff]
  %v67 = vld [vmem:[%s3 + $0x58] sm:$0xff]
  %v68 = vld [vmem:[%s3 + $0x60] sm:$0xff]
  %v69 = vld [vmem:[%s3 + $0x68] sm:$0xff]
  %v70 = vld [vmem:[%s3 + $0x70] sm:$0xff]
  %v71 = vld [vmem:[%s3 + $0x78] sm:$0xff]
  %73 = vset.pattern.permute.xlu0 0
  %74 = vperm.xlu0 %73, %v24
  %v75 = vpop.permute.xlu0 %74
  %78 = vset.pattern.permute.xlu0 0
  %79 = vperm.xlu0 %78, %v25
  %v80 = vpop.permute.xlu0 %79
  %83 = vset.pattern.permute.xlu0 0
  %84 = vperm.xlu0 %83, %v26
  %v85 = vpop.permute.xlu0 %84
  %88 = vset.pattern.permute.xlu0 0
  %89 = vperm.xlu0 %88, %v27
  %v90 = vpop.permute.xlu0 %89
  %93 = vset.pattern.permute.xlu0 0
  %94 = vperm.xlu0 %93, %v28
  %v95 = vpop.permute.xlu0 %94
  %98 = vset.pattern.permute.xlu0 0
  %99 = vperm.xlu0 %98, %v29
  %v100 = vpop.permute.xlu0 %99
  %103 = vset.pattern.permute.xlu0 0
  %104 = vperm.xlu0 %103, %v30
  %v105 = vpop.permute.xlu0 %104
  %108 = vset.pattern.permute.xlu0 0
  %109 = vperm.xlu0 %108, %v31
  %v110 = vpop.permute.xlu0 %109
  %113 = vset.pattern.permute.xlu0 0
  %114 = vperm.xlu0 %113, %v32
  %v115 = vpop.permute.xlu0 %114
  %118 = vset.pattern.permute.xlu0 0
  %119 = vperm.xlu0 %118, %v33
  %v120 = vpop.permute.xlu0 %119
  %123 = vset.pattern.permute.xlu0 0
  %124 = vperm.xlu0 %123, %v34
  %v125 = vpop.permute.xlu0 %124
  %128 = vset.pattern.permute.xlu0 0
  %129 = vperm.xlu0 %128, %v35
  %v130 = vpop.permute.xlu0 %129
  %133 = vset.pattern.permute.xlu0 0
  %134 = vperm.xlu0 %133, %v36
  %v135 = vpop.permute.xlu0 %134
  %138 = vset.pattern.permute.xlu0 0
  %139 = vperm.xlu0 %138, %v37
  %v140 = vpop.permute.xlu0 %139
  %143 = vset.pattern.permute.xlu0 0
  %144 = vperm.xlu0 %143, %v38
  %v145 = vpop.permute.xlu0 %144
  %148 = vset.pattern.permute.xlu0 0
  %149 = vperm.xlu0 %148, %v39
  %v150 = vpop.permute.xlu0 %149
  %v152 = vlaneseq
  %v153 = vshrl.u32 %v152, 7
  %v154 = vsub.s32 0, %v153
  %v155 = vrot.slane %v23, %v154
  %v156 = vmul.f32 %v75, %v155
  %v157 = vmul.f32 %v80, %v155
  %v158 = vmul.f32 %v85, %v155
  %v159 = vmul.f32 %v90, %v155
  %v160 = vmul.f32 %v95, %v155
  %v161 = vmul.f32 %v100, %v155
  %v162 = vmul.f32 %v105, %v155
  %v163 = vmul.f32 %v110, %v155
  %v164 = vmul.f32 %v115, %v155
  %v165 = vmul.f32 %v120, %v155
  %v166 = vmul.f32 %v125, %v155
  %v167 = vmul.f32 %v130, %v155
  %v168 = vmul.f32 %v135, %v155
  %v169 = vmul.f32 %v140, %v155
  %v170 = vmul.f32 %v145, %v155
  %v171 = vmul.f32 %v150, %v155
  %173 = vset.pattern.permute.xlu0 0
  %174 = vperm.xlu0 %173, %v56
  %v175 = vpop.permute.xlu0 %174
  %178 = vset.pattern.permute.xlu0 0
  %179 = vperm.xlu0 %178, %v57
  %v180 = vpop.permute.xlu0 %179
  %183 = vset.pattern.permute.xlu0 0
  %184 = vperm.xlu0 %183, %v58
  %v185 = vpop.permute.xlu0 %184
  %188 = vset.pattern.permute.xlu0 0
  %189 = vperm.xlu0 %188, %v59
  %v190 = vpop.permute.xlu0 %189
  %193 = vset.pattern.permute.xlu0 0
  %194 = vperm.xlu0 %193, %v60
  %v195 = vpop.permute.xlu0 %194
  %198 = vset.pattern.permute.xlu0 0
  %199 = vperm.xlu0 %198, %v61
  %v200 = vpop.permute.xlu0 %199
  %203 = vset.pattern.permute.xlu0 0
  %204 = vperm.xlu0 %203, %v62
  %v205 = vpop.permute.xlu0 %204
  %208 = vset.pattern.permute.xlu0 0
  %209 = vperm.xlu0 %208, %v63
  %v210 = vpop.permute.xlu0 %209
  %213 = vset.pattern.permute.xlu0 0
  %214 = vperm.xlu0 %213, %v64
  %v215 = vpop.permute.xlu0 %214
  %218 = vset.pattern.permute.xlu0 0
  %219 = vperm.xlu0 %218, %v65
  %v220 = vpop.permute.xlu0 %219
  %223 = vset.pattern.permute.xlu0 0
  %224 = vperm.xlu0 %223, %v66
  %v225 = vpop.permute.xlu0 %224
  %228 = vset.pattern.permute.xlu0 0
  %229 = vperm.xlu0 %228, %v67
  %v230 = vpop.permute.xlu0 %229
  %233 = vset.pattern.permute.xlu0 0
  %234 = vperm.xlu0 %233, %v68
  %v235 = vpop.permute.xlu0 %234
  %238 = vset.pattern.permute.xlu0 0
  %239 = vperm.xlu0 %238, %v69
  %v240 = vpop.permute.xlu0 %239
  %243 = vset.pattern.permute.xlu0 0
  %244 = vperm.xlu0 %243, %v70
  %v245 = vpop.permute.xlu0 %244
  %248 = vset.pattern.permute.xlu0 0
  %249 = vperm.xlu0 %248, %v71
  %v250 = vpop.permute.xlu0 %249
  %v252 = vadd.f32 %v156, %v175
  %v253 = vadd.f32 %v157, %v180
  %v254 = vadd.f32 %v158, %v185
  %v255 = vadd.f32 %v159, %v190
  %v256 = vadd.f32 %v160, %v195
  %v257 = vadd.f32 %v161, %v200
  %v258 = vadd.f32 %v162, %v205
  %v259 = vadd.f32 %v163, %v210
  %v260 = vadd.f32 %v164, %v215
  %v261 = vadd.f32 %v165, %v220
  %v262 = vadd.f32 %v166, %v225
  %v263 = vadd.f32 %v167, %v230
  %v264 = vadd.f32 %v168, %v235
  %v265 = vadd.f32 %v169, %v240
  %v266 = vadd.f32 %v170, %v245
  %v267 = vadd.f32 %v171, %v250
  %v268 = vxor.u32 %v252, 2147483648
  %v269 = vxor.u32 %v253, 2147483648
  %v270 = vxor.u32 %v254, 2147483648
  %v271 = vxor.u32 %v255, 2147483648
  %v272 = vmul.f32 %v268, 1.442695
  %v273 = vpow.pop %v272
  %v274 = vmul.f32 %v269, 1.442695
  %v275 = vpow.pop %v274
  %v276 = vmul.f32 %v270, 1.442695
  %v277 = vpow.pop %v276
  %v278 = vmul.f32 %v271, 1.442695
  %v279 = vpow.pop %v278
  %v280 = vadd.f32 %v273, 1.0
  %v281 = vadd.f32 %v275, 1.0
  %v282 = vadd.f32 %v277, 1.0
  %v283 = vadd.f32 %v279, 1.0
  %v284 = vrcp.pop %v280
  %v285 = vmul.f32 1.0, %v284
  %v286 = vrcp.pop %v281
  %v287 = vmul.f32 1.0, %v286
  %v288 = vrcp.pop %v282
  %v289 = vmul.f32 1.0, %v288
  %v290 = vrcp.pop %v283
  %v291 = vmul.f32 1.0, %v290
  %v292 = vxor.u32 %v256, 2147483648
  %v293 = vxor.u32 %v257, 2147483648
  %v294 = vxor.u32 %v258, 2147483648
  %v295 = vxor.u32 %v259, 2147483648
  %v296 = vmul.f32 %v292, 1.442695
  %v297 = vpow.pop %v296
  %v298 = vmul.f32 %v293, 1.442695
  %v299 = vpow.pop %v298
  %v300 = vmul.f32 %v294, 1.442695
  %v301 = vpow.pop %v300
  %v302 = vmul.f32 %v295, 1.442695
  %v303 = vpow.pop %v302
  %v304 = vadd.f32 %v297, 1.0
  %v305 = vadd.f32 %v299, 1.0
  %v306 = vadd.f32 %v301, 1.0
  %v307 = vadd.f32 %v303, 1.0
  %v308 = vrcp.pop %v304
  %v309 = vmul.f32 1.0, %v308
  %v310 = vrcp.pop %v305
  %v311 = vmul.f32 1.0, %v310
  %v312 = vrcp.pop %v306
  %v313 = vmul.f32 1.0, %v312
  %v314 = vrcp.pop %v307
  %v315 = vmul.f32 1.0, %v314
  %v316 = vtanh.pop %v260
  %v317 = vtanh.pop %v261
  %v318 = vtanh.pop %v262
  %v319 = vtanh.pop %v263
  %v320 = vxor.u32 %v264, 2147483648
  %v321 = vxor.u32 %v265, 2147483648
  %v322 = vxor.u32 %v266, 2147483648
  %v323 = vxor.u32 %v267, 2147483648
  %v324 = vmul.f32 %v320, 1.442695
  %v325 = vpow.pop %v324
  %v326 = vmul.f32 %v321, 1.442695
  %v327 = vpow.pop %v326
  %v328 = vmul.f32 %v322, 1.442695
  %v329 = vpow.pop %v328
  %v330 = vmul.f32 %v323, 1.442695
  %v331 = vpow.pop %v330
  %v332 = vadd.f32 %v325, 1.0
  %v333 = vadd.f32 %v327, 1.0
  %v334 = vadd.f32 %v329, 1.0
  %v335 = vadd.f32 %v331, 1.0
  %v336 = vrcp.pop %v332
  %v337 = vmul.f32 1.0, %v336
  %v338 = vrcp.pop %v333
  %v339 = vmul.f32 1.0, %v338
  %v340 = vrcp.pop %v334
  %v341 = vmul.f32 1.0, %v340
  %v342 = vrcp.pop %v335
  %v343 = vmul.f32 1.0, %v342
  %v344 = vmul.f32 %v309, 0.0
  %v345 = vmul.f32 %v311, 0.0
  %v346 = vmul.f32 %v313, 0.0
  %v347 = vmul.f32 %v315, 0.0
  %v348 = vmul.f32 %v285, %v316
  %v349 = vmul.f32 %v287, %v317
  %v350 = vmul.f32 %v289, %v318
  %v351 = vmul.f32 %v291, %v319
  %v352 = vadd.f32 %v344, %v348
  %v353 = vadd.f32 %v345, %v349
  %v354 = vadd.f32 %v346, %v350
  %v355 = vadd.f32 %v347, %v351
  %v356 = vtanh.pop %v352
  %v357 = vtanh.pop %v353
  %v358 = vtanh.pop %v354
  %v359 = vtanh.pop %v355
  %v360 = vmul.f32 %v337, %v356
  %v361 = vmul.f32 %v339, %v357
  %v362 = vmul.f32 %v341, %v358
  %v363 = vmul.f32 %v343, %v359
  %v364 = vlaneseq
  %v365 = vshrl.u32 %v364, 7
  %v366 = vsub.s32 1, %v365
  %v367 = vrot.slane %v23, %v366
  %v368 = vmul.f32 %v75, %v367
  %v369 = vmul.f32 %v80, %v367
  %v370 = vmul.f32 %v85, %v367
  %v371 = vmul.f32 %v90, %v367
  %v372 = vmul.f32 %v95, %v367
  %v373 = vmul.f32 %v100, %v367
  %v374 = vmul.f32 %v105, %v367
  %v375 = vmul.f32 %v110, %v367
  %v376 = vmul.f32 %v115, %v367
  %v377 = vmul.f32 %v120, %v367
  %v378 = vmul.f32 %v125, %v367
  %v379 = vmul.f32 %v130, %v367
  %v380 = vmul.f32 %v135, %v367
  %v381 = vmul.f32 %v140, %v367
  %v382 = vmul.f32 %v145, %v367
  %v383 = vmul.f32 %v150, %v367
  %v384 = vadd.f32 %v368, %v175
  %v385 = vadd.f32 %v369, %v180
  %v386 = vadd.f32 %v370, %v185
  %v387 = vadd.f32 %v371, %v190
  %v388 = vadd.f32 %v372, %v195
  %v389 = vadd.f32 %v373, %v200
  %v390 = vadd.f32 %v374, %v205
  %v391 = vadd.f32 %v375, %v210
  %v392 = vadd.f32 %v376, %v215
  %v393 = vadd.f32 %v377, %v220
  %v394 = vadd.f32 %v378, %v225
  %v395 = vadd.f32 %v379, %v230
  %v396 = vadd.f32 %v380, %v235
  %v397 = vadd.f32 %v381, %v240
  %v398 = vadd.f32 %v382, %v245
  %v399 = vadd.f32 %v383, %v250
  %vm400 = vcmask 261120
  %v402 = vsel %vm400, %v40, 0
  %v405 = vsel %vm400, %v41, 0
  %v408 = vsel %vm400, %v42, 0
  %v411 = vsel %vm400, %v43, 0
  %v414 = vsel %vm400, %v44, 0
  %v417 = vsel %vm400, %v45, 0
  %v420 = vsel %vm400, %v46, 0
  %v423 = vsel %vm400, %v47, 0
  %v426 = vsel %vm400, %v48, 0
  %v429 = vsel %vm400, %v49, 0
  %v432 = vsel %vm400, %v50, 0
  %v435 = vsel %vm400, %v51, 0
  %v438 = vsel %vm400, %v52, 0
  %v441 = vsel %vm400, %v53, 0
  %v444 = vsel %vm400, %v54, 0
  %v447 = vsel %vm400, %v55, 0
  %449 = vmatprep.subr.mxu0 0.0
  %450 = vmatpush1.msra.mxu0 %v360
  %451 = vmatprep.subr.mxu0 0.0
  %452 = vmatpush1.msra.mxu0 %v361
  %453 = vmatprep.subr.mxu0 0.0
  %454 = vmatpush1.msra.mxu0 %v362
  %455 = vmatprep.subr.mxu0 0.0
  %456 = vmatpush1.msra.mxu0 %v363
  %457 = vmatprep.subr.mxu0 0.0
  %458 = vmatpush1.msra.mxu0 0.0
  %459 = vmatprep.subr.mxu0 0.0
  %460 = vmatpush1.msra.mxu0 0.0
  %461 = vmatprep.subr.mxu0 0.0
  %462 = vmatpush1.msra.mxu0 0.0
  %463 = vmatprep.subr.mxu0 0.0
  %464 = vmatpush1.msra.mxu0 0.0
  %465 = vmatprep.subr.mxu0 0.0
  %466 = vmatpush1.msra.mxu0 0.0
  %467 = vmatprep.subr.mxu0 0.0
  %468 = vmatpush1.msra.mxu0 0.0
  %469 = vmatprep.subr.mxu0 0.0
  %470 = vmatpush1.msra.mxu0 0.0
  %471 = vmatprep.subr.mxu0 0.0
  %472 = vmatpush1.msra.mxu0 0.0
  %473 = vmatprep.subr.mxu0 0.0
  %474 = vmatpush1.msra.mxu0 0.0
  %475 = vmatprep.subr.mxu0 0.0
  %476 = vmatpush1.msra.mxu0 0.0
  %477 = vmatprep.subr.mxu0 0.0
  %478 = vmatpush1.msra.mxu0 0.0
  %479 = vmatprep.subr.mxu0 0.0
  %480 = vmatpush1.msra.mxu0 0.0
  %481 = vmatprep.subr.mxu0 0.0
  %482 = vmatpush1.msra.mxu0 0.0
  %483 = vmatprep.subr.mxu0 0.0
  %484 = vmatpush1.msra.mxu0 0.0
  %485 = vmatprep.subr.mxu0 0.0
  %486 = vmatpush1.msra.mxu0 0.0
  %487 = vmatprep.subr.mxu0 0.0
  %488 = vmatpush1.msra.mxu0 0.0
  %489 = vmatprep.subr.mxu0 0.0
  %490 = vmatpush1.msra.mxu0 0.0
  %491 = vmatprep.subr.mxu0 0.0
  %492 = vmatpush1.msra.mxu0 0.0
  %493 = vmatprep.subr.mxu0 0.0
  %494 = vmatpush1.msra.mxu0 0.0
  %495 = vmatprep.subr.mxu0 0.0
  %496 = vmatpush1.msra.mxu0 0.0
  %497 = vmatprep.subr.mxu0 0.0
  %498 = vmatpush1.msra.mxu0 0.0
  %499 = vmatprep.subr.mxu0 0.0
  %500 = vmatpush1.msra.mxu0 0.0
  %501 = vmatprep.subr.mxu0 0.0
  %502 = vmatpush1.msra.mxu0 0.0
  %503 = vmatprep.subr.mxu0 0.0
  %504 = vmatpush1.msra.mxu0 0.0
  %505 = vmatprep.subr.mxu0 0.0
  %506 = vmatpush1.msra.mxu0 0.0
  %507 = vmatprep.subr.mxu0 0.0
  %508 = vmatpush1.msra.mxu0 0.0
  %509 = vmatprep.subr.mxu0 0.0
  %510 = vmatpush1.msra.mxu0 0.0
  %511 = vmatprep.subr.mxu0 0.0
  %512 = vmatpush1.msra.mxu0 0.0
  %513 = vmatprep.mubr.f32.mxu0 0.0
  %514 = vmatmul.mubr.f32.gmra.mrb[0].mxu0 %v402
  %v515 = vpop.f32.mrb[0].mxu0
  %v516 = vadd.f32 0.0, %v515
  %v517 = vpop.f32.mrb[0].mxu0
  %518 = vmatprep.mubr.f32.mxu0 0.0
  %519 = vmatmul.mubr.f32.gmra.mrb[0].mxu0 %v405
  %v520 = vpop.f32.mrb[0].mxu0
  %v521 = vadd.f32 0.0, %v520
  %v522 = vpop.f32.mrb[0].mxu0
  %523 = vmatprep.mubr.f32.mxu0 0.0
  %524 = vmatmul.mubr.f32.gmra.mrb[0].mxu0 %v408
  %v525 = vpop.f32.mrb[0].mxu0
  %v526 = vadd.f32 0.0, %v525
  %v527 = vpop.f32.mrb[0].mxu0
  %528 = vmatprep.mubr.f32.mxu0 0.0
  %529 = vmatmul.mubr.f32.gmra.mrb[0].mxu0 %v411
  %v530 = vpop.f32.mrb[0].mxu0
  %v531 = vadd.f32 0.0, %v530
  %v532 = vpop.f32.mrb[0].mxu0
  %533 = vmatprep.mubr.f32.mxu0 0.0
  %534 = vmatmul.mubr.f32.gmra.mrb[0].mxu0 %v414
  %v535 = vpop.f32.mrb[0].mxu0
  %v536 = vadd.f32 0.0, %v535
  %v537 = vpop.f32.mrb[0].mxu0
  %538 = vmatprep.mubr.f32.mxu0 0.0
  %539 = vmatmul.mubr.f32.gmra.mrb[0].mxu0 %v417
  %v540 = vpop.f32.mrb[0].mxu0
  %v541 = vadd.f32 0.0, %v540
  %v542 = vpop.f32.mrb[0].mxu0
  %543 = vmatprep.mubr.f32.mxu0 0.0
  %544 = vmatmul.mubr.f32.gmra.mrb[0].mxu0 %v420
  %v545 = vpop.f32.mrb[0].mxu0
  %v546 = vadd.f32 0.0, %v545
  %v547 = vpop.f32.mrb[0].mxu0
  %548 = vmatprep.mubr.f32.mxu0 0.0
  %549 = vmatmul.mubr.f32.gmra.mrb[0].mxu0 %v423
  %v550 = vpop.f32.mrb[0].mxu0
  %v551 = vadd.f32 0.0, %v550
  %v552 = vpop.f32.mrb[0].mxu0
  %553 = vmatprep.mubr.f32.mxu0 0.0
  %554 = vmatmul.mubr.f32.gmra.mrb[0].mxu0 %v426
  %v555 = vpop.f32.mrb[0].mxu0
  %v556 = vadd.f32 0.0, %v555
  %v557 = vpop.f32.mrb[0].mxu0
  %558 = vmatprep.mubr.f32.mxu0 0.0
  %559 = vmatmul.mubr.f32.gmra.mrb[0].mxu0 %v429
  %v560 = vpop.f32.mrb[0].mxu0
  %v561 = vadd.f32 0.0, %v560
  %v562 = vpop.f32.mrb[0].mxu0
  %563 = vmatprep.mubr.f32.mxu0 0.0
  %564 = vmatmul.mubr.f32.gmra.mrb[0].mxu0 %v432
  %v565 = vpop.f32.mrb[0].mxu0
  %v566 = vadd.f32 0.0, %v565
  %v567 = vpop.f32.mrb[0].mxu0
  %568 = vmatprep.mubr.f32.mxu0 0.0
  %569 = vmatmul.mubr.f32.gmra.mrb[0].mxu0 %v435
  %v570 = vpop.f32.mrb[0].mxu0
  %v571 = vadd.f32 0.0, %v570
  %v572 = vpop.f32.mrb[0].mxu0
  %573 = vmatprep.mubr.f32.mxu0 0.0
  %574 = vmatmul.mubr.f32.gmra.mrb[0].mxu0 %v438
  %v575 = vpop.f32.mrb[0].mxu0
  %v576 = vadd.f32 0.0, %v575
  %v577 = vpop.f32.mrb[0].mxu0
  %578 = vmatprep.mubr.f32.mxu0 0.0
  %579 = vmatmul.mubr.f32.gmra.mrb[0].mxu0 %v441
  %v580 = vpop.f32.mrb[0].mxu0
  %v581 = vadd.f32 0.0, %v580
  %v582 = vpop.f32.mrb[0].mxu0
  %583 = vmatprep.mubr.f32.mxu0 0.0
  %584 = vmatmul.mubr.f32.gmra.mrb[0].mxu0 %v444
  %v585 = vpop.f32.mrb[0].mxu0
  %v586 = vadd.f32 0.0, %v585
  %v587 = vpop.f32.mrb[0].mxu0
  %588 = vmatprep.mubr.f32.mxu0 0.0
  %589 = vmatmul.mubr.f32.gmra.mrb[0].mxu0 %v447
  %v590 = vpop.f32.mrb[0].mxu0
  %v591 = vadd.f32 0.0, %v590
  %v592 = vpop.f32.mrb[0].mxu0
  %593 = vdwg.mxu0
  %v594 = vadd.f32 %v384, %v516
  %v595 = vadd.f32 %v385, %v521
  %v596 = vadd.f32 %v386, %v526
  %v597 = vadd.f32 %v387, %v531
  %v598 = vadd.f32 %v388, %v536
  %v599 = vadd.f32 %v389, %v541
  %v600 = vadd.f32 %v390, %v546
  %v601 = vadd.f32 %v391, %v551
  %v602 = vadd.f32 %v392, %v556
  %v603 = vadd.f32 %v393, %v561
  %v604 = vadd.f32 %v394, %v566
  %v605 = vadd.f32 %v395, %v571
  %v606 = vadd.f32 %v396, %v576
  %v607 = vadd.f32 %v397, %v581
  %v608 = vadd.f32 %v398, %v586
  %v609 = vadd.f32 %v399, %v591
  %v610 = vxor.u32 %v594, 2147483648
  %v611 = vxor.u32 %v595, 2147483648
  %v612 = vxor.u32 %v596, 2147483648
  %v613 = vxor.u32 %v597, 2147483648
  %v614 = vmul.f32 %v610, 1.442695
  %v615 = vpow.pop %v614
  %v616 = vmul.f32 %v611, 1.442695
  %v617 = vpow.pop %v616
  %v618 = vmul.f32 %v612, 1.442695
  %v619 = vpow.pop %v618
  %v620 = vmul.f32 %v613, 1.442695
  %v621 = vpow.pop %v620
  %v622 = vadd.f32 %v615, 1.0
  %v623 = vadd.f32 %v617, 1.0
  %v624 = vadd.f32 %v619, 1.0
  %v625 = vadd.f32 %v621, 1.0
  %v626 = vrcp.pop %v622
  %v627 = vmul.f32 1.0, %v626
  %v628 = vrcp.pop %v623
  %v629 = vmul.f32 1.0, %v628
  %v630 = vrcp.pop %v624
  %v631 = vmul.f32 1.0, %v630
  %v632 = vrcp.pop %v625
  %v633 = vmul.f32 1.0, %v632
  %v634 = vxor.u32 %v598, 2147483648
  %v635 = vxor.u32 %v599, 2147483648
  %v636 = vxor.u32 %v600, 2147483648
  %v637 = vxor.u32 %v601, 2147483648
  %v638 = vmul.f32 %v634, 1.442695
  %v639 = vpow.pop %v638
  %v640 = vmul.f32 %v635, 1.442695
  %v641 = vpow.pop %v640
  %v642 = vmul.f32 %v636, 1.442695
  %v643 = vpow.pop %v642
  %v644 = vmul.f32 %v637, 1.442695
  %v645 = vpow.pop %v644
  %v646 = vadd.f32 %v639, 1.0
  %v647 = vadd.f32 %v641, 1.0
  %v648 = vadd.f32 %v643, 1.0
  %v649 = vadd.f32 %v645, 1.0
  %v650 = vrcp.pop %v646
  %v651 = vmul.f32 1.0, %v650
  %v652 = vrcp.pop %v647
  %v653 = vmul.f32 1.0, %v652
  %v654 = vrcp.pop %v648
  %v655 = vmul.f32 1.0, %v654
  %v656 = vrcp.pop %v649
  %v657 = vmul.f32 1.0, %v656
  %v658 = vtanh.pop %v602
  %v659 = vtanh.pop %v603
  %v660 = vtanh.pop %v604
  %v661 = vtanh.pop %v605
  %v662 = vxor.u32 %v606, 2147483648
  %v663 = vxor.u32 %v607, 2147483648
  %v664 = vxor.u32 %v608, 2147483648
  %v665 = vxor.u32 %v609, 2147483648
  %v666 = vmul.f32 %v662, 1.442695
  %v667 = vpow.pop %v666
  %v668 = vmul.f32 %v663, 1.442695
  %v669 = vpow.pop %v668
  %v670 = vmul.f32 %v664, 1.442695
  %v671 = vpow.pop %v670
  %v672 = vmul.f32 %v665, 1.442695
  %v673 = vpow.pop %v672
  %v674 = vadd.f32 %v667, 1.0
  %v675 = vadd.f32 %v669, 1.0
  %v676 = vadd.f32 %v671, 1.0
  %v677 = vadd.f32 %v673, 1.0
  %v678 = vrcp.pop %v674
  %v679 = vmul.f32 1.0, %v678
  %v680 = vrcp.pop %v675
  %v681 = vmul.f32 1.0, %v680
  %v682 = vrcp.pop %v676
  %v683 = vmul.f32 1.0, %v682
  %v684 = vrcp.pop %v677
  %v685 = vmul.f32 1.0, %v684
  %v686 = vmul.f32 %v651, %v352
  %v687 = vmul.f32 %v653, %v353
  %v688 = vmul.f32 %v655, %v354
  %v689 = vmul.f32 %v657, %v355
  %v690 = vmul.f32 %v627, %v658
  %v691 = vmul.f32 %v629, %v659
  %v692 = vmul.f32 %v631, %v660
  %v693 = vmul.f32 %v633, %v661
  %v694 = vadd.f32 %v686, %v690
  %v695 = vadd.f32 %v687, %v691
  %v696 = vadd.f32 %v688, %v692
  %v697 = vadd.f32 %v689, %v693
  %v698 = vtanh.pop %v694
  %v699 = vtanh.pop %v695
  %v700 = vtanh.pop %v696
  %v701 = vtanh.pop %v697
  %v702 = vmul.f32 %v679, %v698
  %v703 = vmul.f32 %v681, %v699
  %v704 = vmul.f32 %v683, %v700
  %v705 = vmul.f32 %v685, %v701
  %v706 = vlaneseq
  %v707 = vshrl.u32 %v706, 7
  %v708 = vsub.s32 2, %v707
  %v709 = vrot.slane %v23, %v708
  %v710 = vmul.f32 %v75, %v709
  %v711 = vmul.f32 %v80, %v709
  %v712 = vmul.f32 %v85, %v709
  %v713 = vmul.f32 %v90, %v709
  %v714 = vmul.f32 %v95, %v709
  %v715 = vmul.f32 %v100, %v709
  %v716 = vmul.f32 %v105, %v709
  %v717 = vmul.f32 %v110, %v709
  %v718 = vmul.f32 %v115, %v709
  %v719 = vmul.f32 %v120, %v709
  %v720 = vmul.f32 %v125, %v709
  %v721 = vmul.f32 %v130, %v709
  %v722 = vmul.f32 %v135, %v709
  %v723 = vmul.f32 %v140, %v709
  %v724 = vmul.f32 %v145, %v709
  %v725 = vmul.f32 %v150, %v709
  %v726 = vadd.f32 %v710, %v175
  %v727 = vadd.f32 %v711, %v180
  %v728 = vadd.f32 %v712, %v185
  %v729 = vadd.f32 %v713, %v190
  %v730 = vadd.f32 %v714, %v195
  %v731 = vadd.f32 %v715, %v200
  %v732 = vadd.f32 %v716, %v205
  %v733 = vadd.f32 %v717, %v210
  %v734 = vadd.f32 %v718, %v215
  %v735 = vadd.f32 %v719, %v220
  %v736 = vadd.f32 %v720, %v225
  %v737 = vadd.f32 %v721, %v230
  %v738 = vadd.f32 %v722, %v235
  %v739 = vadd.f32 %v723, %v240
  %v740 = vadd.f32 %v724, %v245
  %v741 = vadd.f32 %v725, %v250
  %742 = vmatprep.subr.mxu0 0.0
  %743 = vmatpush1.msra.mxu0 %v702
  %744 = vmatprep.subr.mxu0 0.0
  %745 = vmatpush1.msra.mxu0 %v703
  %746 = vmatprep.subr.mxu0 0.0
  %747 = vmatpush1.msra.mxu0 %v704
  %748 = vmatprep.subr.mxu0 0.0
  %749 = vmatpush1.msra.mxu0 %v705
  %750 = vmatprep.subr.mxu0 0.0
  %751 = vmatpush1.msra.mxu0 0.0
  %752 = vmatprep.subr.mxu0 0.0
  %753 = vmatpush1.msra.mxu0 0.0
  %754 = vmatprep.subr.mxu0 0.0
  %755 = vmatpush1.msra.mxu0 0.0
  %756 = vmatprep.subr.mxu0 0.0
  %757 = vmatpush1.msra.mxu0 0.0
  %758 = vmatprep.subr.mxu0 0.0
  %759 = vmatpush1.msra.mxu0 0.0
  %760 = vmatprep.subr.mxu0 0.0
  %761 = vmatpush1.msra.mxu0 0.0
  %762 = vmatprep.subr.mxu0 0.0
  %763 = vmatpush1.msra.mxu0 0.0
  %764 = vmatprep.subr.mxu0 0.0
  %765 = vmatpush1.msra.mxu0 0.0
  %766 = vmatprep.subr.mxu0 0.0
  %767 = vmatpush1.msra.mxu0 0.0
  %768 = vmatprep.subr.mxu0 0.0
  %769 = vmatpush1.msra.mxu0 0.0
  %770 = vmatprep.subr.mxu0 0.0
  %771 = vmatpush1.msra.mxu0 0.0
  %772 = vmatprep.subr.mxu0 0.0
  %773 = vmatpush1.msra.mxu0 0.0
  %774 = vmatprep.subr.mxu0 0.0
  %775 = vmatpush1.msra.mxu0 0.0
  %776 = vmatprep.subr.mxu0 0.0
  %777 = vmatpush1.msra.mxu0 0.0
  %778 = vmatprep.subr.mxu0 0.0
  %779 = vmatpush1.msra.mxu0 0.0
  %780 = vmatprep.subr.mxu0 0.0
  %781 = vmatpush1.msra.mxu0 0.0
  %782 = vmatprep.subr.mxu0 0.0
  %783 = vmatpush1.msra.mxu0 0.0
  %784 = vmatprep.subr.mxu0 0.0
  %785 = vmatpush1.msra.mxu0 0.0
  %786 = vmatprep.subr.mxu0 0.0
  %787 = vmatpush1.msra.mxu0 0.0
  %788 = vmatprep.subr.mxu0 0.0
  %789 = vmatpush1.msra.mxu0 0.0
  %790 = vmatprep.subr.mxu0 0.0
  %791 = vmatpush1.msra.mxu0 0.0
  %792 = vmatprep.subr.mxu0 0.0
  %793 = vmatpush1.msra.mxu0 0.0
  %794 = vmatprep.subr.mxu0 0.0
  %795 = vmatpush1.msra.mxu0 0.0
  %796 = vmatprep.subr.mxu0 0.0
  %797 = vmatpush1.msra.mxu0 0.0
  %798 = vmatprep.subr.mxu0 0.0
  %799 = vmatpush1.msra.mxu0 0.0
  %800 = vmatprep.subr.mxu0 0.0
  %801 = vmatpush1.msra.mxu0 0.0
  %802 = vmatprep.subr.mxu0 0.0
  %803 = vmatpush1.msra.mxu0 0.0
  %804 = vmatprep.subr.mxu0 0.0
  %805 = vmatpush1.msra.mxu0 0.0
  %806 = vmatprep.mubr.f32.mxu0 0.0
  %807 = vmatmul.mubr.f32.gmra.mrb[0].mxu0 %v402
  %v808 = vpop.f32.mrb[0].mxu0
  %v809 = vadd.f32 0.0, %v808
  %v810 = vpop.f32.mrb[0].mxu0
  %811 = vmatprep.mubr.f32.mxu0 0.0
  %812 = vmatmul.mubr.f32.gmra.mrb[0].mxu0 %v405
  %v813 = vpop.f32.mrb[0].mxu0
  %v814 = vadd.f32 0.0, %v813
  %v815 = vpop.f32.mrb[0].mxu0
  %816 = vmatprep.mubr.f32.mxu0 0.0
  %817 = vmatmul.mubr.f32.gmra.mrb[0].mxu0 %v408
  %v818 = vpop.f32.mrb[0].mxu0
  %v819 = vadd.f32 0.0, %v818
  %v820 = vpop.f32.mrb[0].mxu0
  %821 = vmatprep.mubr.f32.mxu0 0.0
  %822 = vmatmul.mubr.f32.gmra.mrb[0].mxu0 %v411
  %v823 = vpop.f32.mrb[0].mxu0
  %v824 = vadd.f32 0.0, %v823
  %v825 = vpop.f32.mrb[0].mxu0
  %826 = vmatprep.mubr.f32.mxu0 0.0
  %827 = vmatmul.mubr.f32.gmra.mrb[0].mxu0 %v414
  %v828 = vpop.f32.mrb[0].mxu0
  %v829 = vadd.f32 0.0, %v828
  %v830 = vpop.f32.mrb[0].mxu0
  %831 = vmatprep.mubr.f32.mxu0 0.0
  %832 = vmatmul.mubr.f32.gmra.mrb[0].mxu0 %v417
  %v833 = vpop.f32.mrb[0].mxu0
  %v834 = vadd.f32 0.0, %v833
  %v835 = vpop.f32.mrb[0].mxu0
  %836 = vmatprep.mubr.f32.mxu0 0.0
  %837 = vmatmul.mubr.f32.gmra.mrb[0].mxu0 %v420
  %v838 = vpop.f32.mrb[0].mxu0
  %v839 = vadd.f32 0.0, %v838
  %v840 = vpop.f32.mrb[0].mxu0
  %841 = vmatprep.mubr.f32.mxu0 0.0
  %842 = vmatmul.mubr.f32.gmra.mrb[0].mxu0 %v423
  %v843 = vpop.f32.mrb[0].mxu0
  %v844 = vadd.f32 0.0, %v843
  %v845 = vpop.f32.mrb[0].mxu0
  %846 = vmatprep.mubr.f32.mxu0 0.0
  %847 = vmatmul.mubr.f32.gmra.mrb[0].mxu0 %v426
  %v848 = vpop.f32.mrb[0].mxu0
  %v849 = vadd.f32 0.0, %v848
  %v850 = vpop.f32.mrb[0].mxu0
  %851 = vmatprep.mubr.f32.mxu0 0.0
  %852 = vmatmul.mubr.f32.gmra.mrb[0].mxu0 %v429
  %v853 = vpop.f32.mrb[0].mxu0
  %v854 = vadd.f32 0.0, %v853
  %v855 = vpop.f32.mrb[0].mxu0
  %856 = vmatprep.mubr.f32.mxu0 0.0
  %857 = vmatmul.mubr.f32.gmra.mrb[0].mxu0 %v432
  %v858 = vpop.f32.mrb[0].mxu0
  %v859 = vadd.f32 0.0, %v858
  %v860 = vpop.f32.mrb[0].mxu0
  %861 = vmatprep.mubr.f32.mxu0 0.0
  %862 = vmatmul.mubr.f32.gmra.mrb[0].mxu0 %v435
  %v863 = vpop.f32.mrb[0].mxu0
  %v864 = vadd.f32 0.0, %v863
  %v865 = vpop.f32.mrb[0].mxu0
  %866 = vmatprep.mubr.f32.mxu0 0.0
  %867 = vmatmul.mubr.f32.gmra.mrb[0].mxu0 %v438
  %v868 = vpop.f32.mrb[0].mxu0
  %v869 = vadd.f32 0.0, %v868
  %v870 = vpop.f32.mrb[0].mxu0
  %871 = vmatprep.mubr.f32.mxu0 0.0
  %872 = vmatmul.mubr.f32.gmra.mrb[0].mxu0 %v441
  %v873 = vpop.f32.mrb[0].mxu0
  %v874 = vadd.f32 0.0, %v873
  %v875 = vpop.f32.mrb[0].mxu0
  %876 = vmatprep.mubr.f32.mxu0 0.0
  %877 = vmatmul.mubr.f32.gmra.mrb[0].mxu0 %v444
  %v878 = vpop.f32.mrb[0].mxu0
  %v879 = vadd.f32 0.0, %v878
  %v880 = vpop.f32.mrb[0].mxu0
  %881 = vmatprep.mubr.f32.mxu0 0.0
  %882 = vmatmul.mubr.f32.gmra.mrb[0].mxu0 %v447
  %v883 = vpop.f32.mrb[0].mxu0
  %v884 = vadd.f32 0.0, %v883
  %v885 = vpop.f32.mrb[0].mxu0
  %886 = vdwg.mxu0
  %v887 = vadd.f32 %v726, %v809
  %v888 = vadd.f32 %v727, %v814
  %v889 = vadd.f32 %v728, %v819
  %v890 = vadd.f32 %v729, %v824
  %v891 = vadd.f32 %v730, %v829
  %v892 = vadd.f32 %v731, %v834
  %v893 = vadd.f32 %v732, %v839
  %v894 = vadd.f32 %v733, %v844
  %v895 = vadd.f32 %v734, %v849
  %v896 = vadd.f32 %v735, %v854
  %v897 = vadd.f32 %v736, %v859
  %v898 = vadd.f32 %v737, %v864
  %v899 = vadd.f32 %v738, %v869
  %v900 = vadd.f32 %v739, %v874
  %v901 = vadd.f32 %v740, %v879
  %v902 = vadd.f32 %v741, %v884
  %v903 = vxor.u32 %v887, 2147483648
  %v904 = vxor.u32 %v888, 2147483648
  %v905 = vxor.u32 %v889, 2147483648
  %v906 = vxor.u32 %v890, 2147483648
  %v907 = vmul.f32 %v903, 1.442695
  %v908 = vpow.pop %v907
  %v909 = vmul.f32 %v904, 1.442695
  %v910 = vpow.pop %v909
  %v911 = vmul.f32 %v905, 1.442695
  %v912 = vpow.pop %v911
  %v913 = vmul.f32 %v906, 1.442695
  %v914 = vpow.pop %v913
  %v915 = vadd.f32 %v908, 1.0
  %v916 = vadd.f32 %v910, 1.0
  %v917 = vadd.f32 %v912, 1.0
  %v918 = vadd.f32 %v914, 1.0
  %v919 = vrcp.pop %v915
  %v920 = vmul.f32 1.0, %v919
  %v921 = vrcp.pop %v916
  %v922 = vmul.f32 1.0, %v921
  %v923 = vrcp.pop %v917
  %v924 = vmul.f32 1.0, %v923
  %v925 = vrcp.pop %v918
  %v926 = vmul.f32 1.0, %v925
  %v927 = vxor.u32 %v891, 2147483648
  %v928 = vxor.u32 %v892, 2147483648
  %v929 = vxor.u32 %v893, 2147483648
  %v930 = vxor.u32 %v894, 2147483648
  %v931 = vmul.f32 %v927, 1.442695
  %v932 = vpow.pop %v931
  %v933 = vmul.f32 %v928, 1.442695
  %v934 = vpow.pop %v933
  %v935 = vmul.f32 %v929, 1.442695
  %v936 = vpow.pop %v935
  %v937 = vmul.f32 %v930, 1.442695
  %v938 = vpow.pop %v937
  %v939 = vadd.f32 %v932, 1.0
  %v940 = vadd.f32 %v934, 1.0
  %v941 = vadd.f32 %v936, 1.0
  %v942 = vadd.f32 %v938, 1.0
  %v943 = vrcp.pop %v939
  %v944 = vmul.f32 1.0, %v943
  %v945 = vrcp.pop %v940
  %v946 = vmul.f32 1.0, %v945
  %v947 = vrcp.pop %v941
  %v948 = vmul.f32 1.0, %v947
  %v949 = vrcp.pop %v942
  %v950 = vmul.f32 1.0, %v949
  %v951 = vtanh.pop %v895
  %v952 = vtanh.pop %v896
  %v953 = vtanh.pop %v897
  %v954 = vtanh.pop %v898
  %v955 = vxor.u32 %v899, 2147483648
  %v956 = vxor.u32 %v900, 2147483648
  %v957 = vxor.u32 %v901, 2147483648
  %v958 = vxor.u32 %v902, 2147483648
  %v959 = vmul.f32 %v955, 1.442695
  %v960 = vpow.pop %v959
  %v961 = vmul.f32 %v956, 1.442695
  %v962 = vpow.pop %v961
  %v963 = vmul.f32 %v957, 1.442695
  %v964 = vpow.pop %v963
  %v965 = vmul.f32 %v958, 1.442695
  %v966 = vpow.pop %v965
  %v967 = vadd.f32 %v960, 1.0
  %v968 = vadd.f32 %v962, 1.0
  %v969 = vadd.f32 %v964, 1.0
  %v970 = vadd.f32 %v966, 1.0
  %v971 = vrcp.pop %v967
  %v972 = vmul.f32 1.0, %v971
  %v973 = vrcp.pop %v968
  %v974 = vmul.f32 1.0, %v973
  %v975 = vrcp.pop %v969
  %v976 = vmul.f32 1.0, %v975
  %v977 = vrcp.pop %v970
  %v978 = vmul.f32 1.0, %v977
  %v979 = vmul.f32 %v944, %v694
  %v980 = vmul.f32 %v946, %v695
  %v981 = vmul.f32 %v948, %v696
  %v982 = vmul.f32 %v950, %v697
  %v983 = vmul.f32 %v920, %v951
  %v984 = vmul.f32 %v922, %v952
  %v985 = vmul.f32 %v924, %v953
  %v986 = vmul.f32 %v926, %v954
  %v987 = vadd.f32 %v979, %v983
  %v988 = vadd.f32 %v980, %v984
  %v989 = vadd.f32 %v981, %v985
  %v990 = vadd.f32 %v982, %v986
  %v991 = vtanh.pop %v987
  %v992 = vtanh.pop %v988
  %v993 = vtanh.pop %v989
  %v994 = vtanh.pop %v990
  %v995 = vmul.f32 %v972, %v991
  %v996 = vmul.f32 %v974, %v992
  %v997 = vmul.f32 %v976, %v993
  %v998 = vmul.f32 %v978, %v994
  %v999 = vld [vmem:[%s4] sm:$0xff]
  %v1000 = vld [vmem:[%s5] sm:$0xff]
  %1002 = vset.pattern.permute.xlu0 0
  %1003 = vperm.xlu0 %1002, %v1000
  %v1004 = vpop.permute.xlu0 %1003
  %v1007 = vsel %vm400, %v999, 0
  %1009 = vmatprep.subr.mxu0 0.0
  %1010 = vmatpush1.msra.mxu0 %v995
  %1011 = vmatprep.subr.mxu0 0.0
  %1012 = vmatpush1.msra.mxu0 %v996
  %1013 = vmatprep.subr.mxu0 0.0
  %1014 = vmatpush1.msra.mxu0 %v997
  %1015 = vmatprep.subr.mxu0 0.0
  %1016 = vmatpush1.msra.mxu0 %v998
  %1017 = vmatprep.subr.mxu0 0.0
  %1018 = vmatpush1.msra.mxu0 0.0
  %1019 = vmatprep.subr.mxu0 0.0
  %1020 = vmatpush1.msra.mxu0 0.0
  %1021 = vmatprep.subr.mxu0 0.0
  %1022 = vmatpush1.msra.mxu0 0.0
  %1023 = vmatprep.subr.mxu0 0.0
  %1024 = vmatpush1.msra.mxu0 0.0
  %1025 = vmatprep.subr.mxu0 0.0
  %1026 = vmatpush1.msra.mxu0 0.0
  %1027 = vmatprep.subr.mxu0 0.0
  %1028 = vmatpush1.msra.mxu0 0.0
  %1029 = vmatprep.subr.mxu0 0.0
  %1030 = vmatpush1.msra.mxu0 0.0
  %1031 = vmatprep.subr.mxu0 0.0
  %1032 = vmatpush1.msra.mxu0 0.0
  %1033 = vmatprep.subr.mxu0 0.0
  %1034 = vmatpush1.msra.mxu0 0.0
  %1035 = vmatprep.subr.mxu0 0.0
  %1036 = vmatpush1.msra.mxu0 0.0
  %1037 = vmatprep.subr.mxu0 0.0
  %1038 = vmatpush1.msra.mxu0 0.0
  %1039 = vmatprep.subr.mxu0 0.0
  %1040 = vmatpush1.msra.mxu0 0.0
  %1041 = vmatprep.subr.mxu0 0.0
  %1042 = vmatpush1.msra.mxu0 0.0
  %1043 = vmatprep.subr.mxu0 0.0
  %1044 = vmatpush1.msra.mxu0 0.0
  %1045 = vmatprep.subr.mxu0 0.0
  %1046 = vmatpush1.msra.mxu0 0.0
  %1047 = vmatprep.subr.mxu0 0.0
  %1048 = vmatpush1.msra.mxu0 0.0
  %1049 = vmatprep.subr.mxu0 0.0
  %1050 = vmatpush1.msra.mxu0 0.0
  %1051 = vmatprep.subr.mxu0 0.0
  %1052 = vmatpush1.msra.mxu0 0.0
  %1053 = vmatprep.subr.mxu0 0.0
  %1054 = vmatpush1.msra.mxu0 0.0
  %1055 = vmatprep.subr.mxu0 0.0
  %1056 = vmatpush1.msra.mxu0 0.0
  %1057 = vmatprep.subr.mxu0 0.0
  %1058 = vmatpush1.msra.mxu0 0.0
  %1059 = vmatprep.subr.mxu0 0.0
  %1060 = vmatpush1.msra.mxu0 0.0
  %1061 = vmatprep.subr.mxu0 0.0
  %1062 = vmatpush1.msra.mxu0 0.0
  %1063 = vmatprep.subr.mxu0 0.0
  %1064 = vmatpush1.msra.mxu0 0.0
  %1065 = vmatprep.subr.mxu0 0.0
  %1066 = vmatpush1.msra.mxu0 0.0
  %1067 = vmatprep.subr.mxu0 0.0
  %1068 = vmatpush1.msra.mxu0 0.0
  %1069 = vmatprep.subr.mxu0 0.0
  %1070 = vmatpush1.msra.mxu0 0.0
  %1071 = vmatprep.subr.mxu0 0.0
  %1072 = vmatpush1.msra.mxu0 0.0
  %1073 = vmatprep.mubr.f32.mxu0 0.0
  %1074 = vmatmul.mubr.f32.gmra.mrb[0].mxu0 %v1007
  %v1075 = vpop.f32.mrb[0].mxu0
  %v1076 = vadd.f32 %v1004, %v1075
  %v1077 = vpop.f32.mrb[0].mxu0
  %1078 = vdwg.mxu0
  %vm1079 = vcmask 15360
  %1080 = vst.msk [vmem:[%s6] sm:$0xff] %vm1079, %v1076
  // Predicated region
  $region26: #{tpu_custom_call.1} parent=0 // pred_check
    _
  $region27: #{tpu_custom_call.1} parent=0 // pred_check_branch
    %1082 = sbr.rel (0) target = $region29
  $region28: #{tpu_custom_call.1} parent=0 // pred_region
    _
  $region29: #{tpu_custom_call.1} parent=0 // pred_fallthru
    _
  // Predicated region
  $region30: #{tpu_custom_call.1} parent=0 // pred_check
    _
  $region31: #{tpu_custom_call.1} parent=0 // pred_check_branch
    %1084 = sbr.rel (0) target = $region33
  $region32: #{tpu_custom_call.1} parent=0 // pred_region
    _
  $region33: #{tpu_custom_call.1} parent=0 // pred_fallthru
    _

</llo_original>
